<compile_context>
chip_gen: v6e
topology: v6e:2x2x1
jax: 0.10.0
libtpu: 0.0.40
codegen_flags: <defaults>
</compile_context>

<pallas_src>
import functools

import jax
import jax.numpy as jnp
from jax import lax
from jax.experimental import pallas as pl
from jax.experimental.pallas import tpu as pltpu


# ---------------------------------------------------------------------------
# helpers
# ---------------------------------------------------------------------------
def _pick(dim, target):
    # Use the aligned target tile when it divides the dim, otherwise fall back
    # to the full dim (always satisfies the (8,128)/full-dim BlockSpec rule).
    # TODO(synk): masked tail tiles for ragged (non-divisible) production shapes.
    return target if (dim > target and dim % target == 0) else dim


def _prefers_bf16_exp():
    # bf16 EUP exists on v6e / v7x; v5e and older have no bf16 EUP path.
    try:
        kind = jax.devices()[0].device_kind.lower()
    except Exception:
        return False
    return any(tag in kind for tag in ("v6", "v7", "7x"))


# ---------------------------------------------------------------------------
# Kernel 1: tiled linear  y = x @ W + b   (used for both qkv and proj)
# ---------------------------------------------------------------------------
def _linear_kernel(x_ref, w_ref, b_ref, o_ref, acc_ref):
    k = pl.program_id(2)

    @pl.when(k == 0)
    def _():
        acc_ref[...] = jnp.zeros_like(acc_ref)

    acc_ref[...] += jnp.dot(x_ref[...], w_ref[...],
                            preferred_element_type=jnp.float32)

    @pl.when(k == pl.num_programs(2) - 1)
    def _():
        o_ref[...] = (acc_ref[...]
                      + b_ref[...].astype(jnp.float32)).astype(o_ref.dtype)


def linear(x, w, b, *, out_dtype=None, tm=512, tn=512, tk=512):
    # bf16 operands: 512-tiles double buffered are a few MiB -> fits the
    # scoped-VMEM defaults on v5e (16 MiB) and v6e/v7x (32 MiB).
    M, K = x.shape
    K2, N = w.shape
    assert K == K2
    out_dtype = x.dtype if out_dtype is None else out_dtype
    bm, bn, bk = _pick(M, tm), _pick(N, tn), _pick(K, tk)
    grid = (M // bm, N // bn, K // bk)
    b2d = b.reshape(1, N)
    return pl.pallas_call(
        _linear_kernel,
        out_shape=jax.ShapeDtypeStruct((M, N), out_dtype),
        grid_spec=pltpu.PrefetchScalarGridSpec(
            num_scalar_prefetch=0,
            grid=grid,
            in_specs=[
                pl.BlockSpec((bm, bk), lambda i, j, k: (i, k)),
                pl.BlockSpec((bk, bn), lambda i, j, k: (k, j)),
                pl.BlockSpec((1, bn), lambda i, j, k: (0, j)),
            ],
            out_specs=pl.BlockSpec((bm, bn), lambda i, j, k: (i, j)),
            scratch_shapes=[pltpu.VMEM((bm, bn), jnp.float32)],
        ),
        compiler_params=pltpu.CompilerParams(
            dimension_semantics=("parallel", "parallel", "arbitrary")),
    )(x, w, b2d)


# ---------------------------------------------------------------------------
# Kernel 2: flash-style scaled-dot-product attention
#   q, k, v: (B, H, N, D);  output: (B, H, N, D)
#   grid = (B, H, q_tiles, kv_tiles), kv axis last & "arbitrary".
#   NOTE: the softmax scale is pre-folded into the q projection weights.
# ---------------------------------------------------------------------------
def _flash_kernel(q_ref, k_ref, v_ref, o_ref, m_ref, l_ref, acc_ref,
                  *, exp_in_bf16):
    ki = pl.program_id(3)

    @pl.when(ki == 0)
    def _():
        m_ref[...] = jnp.full_like(m_ref, -jnp.inf)
        l_ref[...] = jnp.zeros_like(l_ref)
        acc_ref[...] = jnp.zeros_like(acc_ref)

    q = q_ref[0, 0]          # (tq, D)  bf16, already scaled
    k = k_ref[0, 0]          # (tkv, D)
    v = v_ref[0, 0]          # (tkv, D)

    # q @ k^T without an explicit transpose: contract last dims of both.
    s = lax.dot_general(q, k, (((1,), (1,)), ((), ())),
                        preferred_element_type=jnp.float32)          # (tq, tkv)

    m_prev = m_ref[...]                                              # (tq, 1)
    m_new = jnp.maximum(m_prev, jnp.max(s, axis=-1, keepdims=True))
    alpha = jnp.exp(m_prev - m_new)                                  # (tq, 1)
    s_shift = s - m_new
    if exp_in_bf16:
        p = jnp.exp(s_shift.astype(jnp.bfloat16))                    # bf16 EUP
    else:
        p = jnp.exp(s_shift)                                         # f32 EUP

    l_ref[...] = alpha * l_ref[...] + jnp.sum(p.astype(jnp.float32),
                                              axis=-1, keepdims=True)
    pv = jnp.dot(p.astype(v.dtype), v,
                 preferred_element_type=jnp.float32)                 # (tq, D)
    acc_ref[...] = alpha * acc_ref[...] + pv
    m_ref[...] = m_new

    @pl.when(ki == pl.num_programs(3) - 1)
    def _():
        inv = pl.reciprocal(l_ref[...], approx=True)                 # (tq, 1)
        o_ref[0, 0] = (acc_ref[...] * inv).astype(o_ref.dtype)


def flash_attention(q, k, v, *, tq_target=256, tkv_target=256):
    # v6e/v7x: 256-wide MXU likes tq/tkv >= 256; on v5e tkv=128 would also be
    # fine but 256 keeps the step count low.  VMEM footprint at tq=tkv=512,
    # D=64 bf16 is well under 1 MiB, safe even on v7x's 64 MiB part.
    B, H, N, D = q.shape
    assert k.shape == (B, H, N, D) and v.shape == (B, H, N, D)
    tq = _pick(N, tq_target)
    tkv = _pick(N, tkv_target)
    grid = (B, H, N // tq, N // tkv)

    kernel = functools.partial(_flash_kernel, exp_in_bf16=_prefers_bf16_exp())
    q_spec = pl.BlockSpec((1, 1, tq, D), lambda b, h, qi, ki: (b, h, qi, 0))
    k_spec = pl.BlockSpec((1, 1, tkv, D), lambda b, h, qi, ki: (b, h, ki, 0))
    v_spec = pl.BlockSpec((1, 1, tkv, D), lambda b, h, qi, ki: (b, h, ki, 0))
    o_spec = pl.BlockSpec((1, 1, tq, D), lambda b, h, qi, ki: (b, h, qi, 0))

    return pl.pallas_call(
        kernel,
        out_shape=jax.ShapeDtypeStruct((B, H, N, D), q.dtype),
        grid_spec=pltpu.PrefetchScalarGridSpec(
            num_scalar_prefetch=0,
            grid=grid,
            in_specs=[q_spec, k_spec, v_spec],
            out_specs=o_spec,
            scratch_shapes=[
                pltpu.VMEM((tq, 1), jnp.float32),    # running max m
                pltpu.VMEM((tq, 1), jnp.float32),    # running denom l
                pltpu.VMEM((tq, D), jnp.float32),    # output accumulator
            ],
        ),
        compiler_params=pltpu.CompilerParams(
            dimension_semantics=("parallel", "parallel", "parallel",
                                 "arbitrary")),
    )(q, k, v)


# ---------------------------------------------------------------------------
# Attention module (forward only, eval-mode defaults)
# ---------------------------------------------------------------------------
class Attention:
    def __init__(self, dim, num_heads=8, key=None, param_dtype=jnp.bfloat16):
        assert dim % num_heads == 0
        self.dim = dim
        self.num_heads = num_heads
        self.head_dim = dim // num_heads
        self.scale = self.head_dim ** (-0.5)

        key = jax.random.PRNGKey(0) if key is None else key
        k1, k2, k3, k4 = jax.random.split(key, 4)
        bound = 1.0 / (dim ** 0.5)
        # f32 "master" params (used by the pure-JAX reference).
        # NOTE: stored (in, out); a real PyTorch nn.Linear checkpoint is
        # (out, in) and must be transposed when loading.
        self.qkv_w = jax.random.uniform(k1, (dim, 3 * dim), jnp.float32, -bound, bound)
        self.qkv_b = jax.random.uniform(k2, (3 * dim,), jnp.float32, -bound, bound)
        self.proj_w = jax.random.uniform(k3, (dim, dim), jnp.float32, -bound, bound)
        self.proj_b = jax.random.uniform(k4, (dim,), jnp.float32, -bound, bound)

        # Kernel params: softmax scale folded into the q slice, cast to bf16.
        qkv_w_scaled = self.qkv_w.at[:, :dim].multiply(self.scale)
        qkv_b_scaled = self.qkv_b.at[:dim].multiply(self.scale)
        self._qkv_w = qkv_w_scaled.astype(param_dtype)
        self._qkv_b = qkv_b_scaled.astype(param_dtype)
        self._proj_w = self.proj_w.astype(param_dtype)
        self._proj_b = self.proj_b.astype(param_dtype)

    def __call__(self, x):
        B, N, C = x.shape
        H, D = self.num_heads, self.head_dim

        xb = x.astype(self._qkv_w.dtype)

        # qkv projection (tiled bf16 Pallas matmul, f32 accumulation)
        qkv = linear(xb.reshape(B * N, C), self._qkv_w, self._qkv_b)   # (B*N, 3C)

        # (B, N, 3, H, D) -> (3, B, H, N, D): contiguous per-head q/k/v streams
        # for the flash kernel (this layout transpose is left to XLA).
        qkv = qkv.reshape(B, N, 3, H, D).transpose(2, 0, 3, 1, 4)
        q, k, v = qkv[0], qkv[1], qkv[2]
        # q_norm / k_norm are Identity (qk_norm=False); rope is None.
        # TODO(synk): rope / qk_norm / return_attn / dropout branches of the
        # PyTorch module are not implemented (inactive at the defaults used).

        # flash attention over (B, H, N, D)
        o = flash_attention(q, k, v)                                   # (B, H, N, D)

        # head merge (x.transpose(1,2).reshape(B,N,C) in the PyTorch module)
        o = o.transpose(0, 2, 1, 3).reshape(B * N, C)
        # TODO(synk): optionally fuse the output projection into the flash
        # finalize to skip this HBM round-trip.

        # output projection (tiled bf16 Pallas matmul), f32 output like the module
        out = linear(o, self._proj_w, self._proj_b, out_dtype=jnp.float32)
        return out.reshape(B, N, C)


# ---------------------------------------------------------------------------
# Pure-JAX f32 reference for correctness check
# ---------------------------------------------------------------------------
def reference_forward(mod: Attention, x):
    B, N, C = x.shape
    H, D = mod.num_heads, mod.head_dim
    qkv = x @ mod.qkv_w + mod.qkv_b
    qkv = qkv.reshape(B, N, 3, H, D).transpose(2, 0, 3, 1, 4)
    q, k, v = qkv[0], qkv[1], qkv[2]
    scores = jnp.einsum("bhnd,bhmd->bhnm", q * mod.scale, k)
    attn = jax.nn.softmax(scores, axis=-1)
    o = jnp.einsum("bhnm,bhmd->bhnd", attn, v)
    o = o.transpose(0, 2, 1, 3).reshape(B, N, C)
    return o @ mod.proj_w + mod.proj_b


if __name__ == "__main__":
    # Small shapes consistent with the module: B=2, N=16, C=32, num_heads=4 (D=8)
    B, N, C, H = 2, 16, 32, 4
    key = jax.random.PRNGKey(0)
    kx, kp = jax.random.split(key)
    x = jax.random.normal(kx, (B, N, C), jnp.float32)

    attn = Attention(dim=C, num_heads=H, key=kp)
    out = attn(x)
    out = jax.block_until_ready(out)

    ref = reference_forward(attn, x)
    assert out.shape == (B, N, C)
    err = float(jnp.max(jnp.abs(out - ref)))
    # Tolerance covers bf16 operands/weights, bf16 exp (v6e/v7x) and the
    # approx EUP reciprocal in the softmax denominator.
    assert jnp.allclose(out, ref, atol=3e-2, rtol=3e-2), f"max abs err {err}"
    print("KERNEL_OK")
</pallas_src>

<mosaic_0001>
module attributes {stable_mosaic.version = 11 : i64} {
  func.func @_linear_kernel(%arg0: i32, %arg1: i32, %arg2: i32, %arg3: memref<32x32xbf16, #tpu.memory_space<vmem>>, %arg4: memref<32x96xbf16, #tpu.memory_space<vmem>>, %arg5: memref<1x96xbf16, #tpu.memory_space<vmem>>, %arg6: memref<32x96xbf16, #tpu.memory_space<vmem>>, %arg7: memref<32x96xf32, #tpu.memory_space<vmem>>) attributes {dimension_semantics = [#tpu.dimension_semantics<parallel>, #tpu.dimension_semantics<parallel>, #tpu.dimension_semantics<arbitrary>], iteration_bounds = array<i64: 1, 1, 1>, scalar_prefetch = 0 : i64, scratch_operands = 1 : i64, tpu.core_type = #tpu.core_type<tc>, window_params = [{transform_indices = @transform_0, window_bounds = array<i64: 32, 32>}, {transform_indices = @transform_1, window_bounds = array<i64: 32, 96>}, {transform_indices = @transform_2, window_bounds = array<i64: 1, 96>}, {transform_indices = @transform_3, window_bounds = array<i64: 32, 96>}]} {
    %c0_i32 = arith.constant 0 : i32
    %0 = arith.cmpi eq, %arg2, %c0_i32 : i32
    %1 = arith.extui %0 : i1 to i32
    %c0_i32_0 = arith.constant 0 : i32
    %2 = arith.cmpi ne, %1, %c0_i32_0 : i32
    scf.if %2 {
      %cst_10 = arith.constant 0.000000e+00 : f32
      %12 = vector.broadcast %cst_10 : f32 to vector<32x96xf32>
      %c0_11 = arith.constant 0 : index
      %c0_12 = arith.constant 0 : index
      %13 = vector.load %arg7[%c0_11, %c0_12] : memref<32x96xf32, #tpu.memory_space<vmem>>, vector<32x96xf32>
      tpu.vector_store %arg7[%c0_11, %c0_12], %12 {strides = array<i32>} : memref<32x96xf32, #tpu.memory_space<vmem>>, vector<32x96xf32>,
    } else {
    }
    %c0 = arith.constant 0 : index
    %c0_1 = arith.constant 0 : index
    %3 = vector.load %arg7[%c0, %c0_1] : memref<32x96xf32, #tpu.memory_space<vmem>>, vector<32x96xf32>
    %c0_2 = arith.constant 0 : index
    %c0_3 = arith.constant 0 : index
    %4 = vector.load %arg3[%c0_2, %c0_3] : memref<32x32xbf16, #tpu.memory_space<vmem>>, vector<32x32xbf16>
    %c0_4 = arith.constant 0 : index
    %c0_5 = arith.constant 0 : index
    %5 = vector.load %arg4[%c0_4, %c0_5] : memref<32x96xbf16, #tpu.memory_space<vmem>>, vector<32x96xbf16>
    %cst = arith.constant dense<0.000000e+00> : vector<32x96xf32>
    %6 = tpu.matmul %4, %5, %cst {dimension_numbers = #tpu.dot_dimension_numbers<[1], [0], [0], [1], [0, 0, 1, 1], [], []>} : vector<32x32xbf16>, vector<32x96xbf16>, vector<32x96xf32> -> vector<32x96xf32>
    %7 = arith.addf %3, %6 : vector<32x96xf32>
    %c0_6 = arith.constant 0 : index
    %c0_7 = arith.constant 0 : index
    %8 = vector.load %arg7[%c0_6, %c0_7] : memref<32x96xf32, #tpu.memory_space<vmem>>, vector<32x96xf32>
    tpu.vector_store %arg7[%c0_6, %c0_7], %7 {strides = array<i32>} : memref<32x96xf32, #tpu.memory_space<vmem>>, vector<32x96xf32>,
    %c0_i32_8 = arith.constant 0 : i32
    %9 = arith.cmpi eq, %arg2, %c0_i32_8 : i32
    %10 = arith.extui %9 : i1 to i32
    %c0_i32_9 = arith.constant 0 : i32
    %11 = arith.cmpi ne, %10, %c0_i32_9 : i32
    scf.if %11 {
      %c0_10 = arith.constant 0 : index
      %c0_11 = arith.constant 0 : index
      %12 = vector.load %arg7[%c0_10, %c0_11] : memref<32x96xf32, #tpu.memory_space<vmem>>, vector<32x96xf32>
      %c0_12 = arith.constant 0 : index
      %c0_13 = arith.constant 0 : index
      %13 = vector.load %arg5[%c0_12, %c0_13] : memref<1x96xbf16, #tpu.memory_space<vmem>>, vector<1x96xbf16>
      %14 = arith.extf %13 : vector<1x96xbf16> to vector<1x96xf32>
      %15 = vector.broadcast %14 : vector<1x96xf32> to vector<32x96xf32>
      %16 = arith.addf %12, %15 : vector<32x96xf32>
      %17 = arith.truncf %16 : vector<32x96xf32> to vector<32x96xbf16>
      %c0_14 = arith.constant 0 : index
      %c0_15 = arith.constant 0 : index
      %18 = vector.load %arg6[%c0_14, %c0_15] : memref<32x96xbf16, #tpu.memory_space<vmem>>, vector<32x96xbf16>
      tpu.vector_store %arg6[%c0_14, %c0_15], %17 {strides = array<i32>} : memref<32x96xbf16, #tpu.memory_space<vmem>>, vector<32x96xbf16>,
    } else {
    }
    return
  }
  func.func @transform_0(%arg0: i32, %arg1: i32, %arg2: i32) -> (i32, i32) {
    %c0_i32 = arith.constant 0 : i32
    return %arg0, %arg2 : i32, i32
  }
  func.func @transform_1(%arg0: i32, %arg1: i32, %arg2: i32) -> (i32, i32) {
    %c0_i32 = arith.constant 0 : i32
    return %arg2, %arg1 : i32, i32
  }
  func.func @transform_2(%arg0: i32, %arg1: i32, %arg2: i32) -> (i32, i32) {
    %c0_i32 = arith.constant 0 : i32
    %c0_i32_0 = arith.constant 0 : i32
    return %c0_i32, %arg1 : i32, i32
  }
  func.func @transform_3(%arg0: i32, %arg1: i32, %arg2: i32) -> (i32, i32) {
    %c0_i32 = arith.constant 0 : i32
    return %arg0, %arg1 : i32, i32
  }
}

</mosaic_0001>

<llo_original>
// kernel: tpu_custom_call.1
$region0: #{tpu_custom_call.1}
  #allocation0 [shape = 'u32[]', space=smem, size = 0x4, offset = 0x4, fixed_abs, tag = 'smem constant byte address 0x4 - core index']
  #allocation1 [shape = 'u32[144,128]{1,0:T(1,128)}', space=vmem, size = 0x12000, scoped, tag = 'internal scratch']
  #allocation2 [shape = 'f32[32,96]{1,0:T(8,128)}', space=vmem, size = 0x4000, scoped, tag = 'scratch operand']
  %s0 = inlined_call_operand.hbm [shape: bf16[32,32], index: 0, kind: input, shape index: {}]
  %s1 = inlined_call_operand.hbm [shape: bf16[32,96], index: 1, kind: input, shape index: {}]
  %s2 = inlined_call_operand.vmem [shape: bf16[1,96], index: 2, kind: input, shape index: {}]
  %s3 = inlined_call_operand.hbm [shape: bf16[32,96], index: 3, kind: output, shape index: {}]
  %s4 = sld [smem:[#allocation0]]
  $region38: #{tpu_custom_call.1} parent=0
    _
  %s6 = ssub.s32 1, %s4
  %s7 = scalar_select 0, %s6, %s4
  $region1: #{tpu_custom_call.1} parent=0
    #allocation3 [shape = 'u8[8192]{0}', space=vmem, size = 0x2000, scoped, tag = 'input window, operand 0, single buffered']
    #allocation4 [shape = 's32[1]{0}', space=sflag, size = 0x4, scoped, tag = 'scoped memory for tpu_custom_call.1']
    #allocation5 [shape = 's32[1]{0}', space=sflag, size = 0x4, scoped, tag = 'scoped memory for tpu_custom_call.1']
    #allocation6 [shape = 'u8[8192]{0}', space=vmem, size = 0x2000, scoped, tag = 'input window, operand 1, single buffered']
    #allocation7 [shape = 's32[1]{0}', space=sflag, size = 0x4, scoped, tag = 'scoped memory for tpu_custom_call.1']
    #allocation8 [shape = 'u8[8192]{0}', space=vmem, size = 0x2000, scoped, tag = 'output window, operand 0, single buffered']
    %8 = vsyncpa [#allocation4], 0
    %9 = vsyncpa [#allocation7], 0
    %10 = vsyncpa [#allocation5], 0
    // Predicated region
    $region2: #{tpu_custom_call.1} parent=1 // pred_check
      _
    $region3: #{tpu_custom_call.1} parent=1 // pred_check_branch
      %12 = sbr.rel (0) target = $region5
    $region4: #{tpu_custom_call.1} parent=1 // pred_region
      %s14 = ssub.s32 256, 256
      %15 = vsyncadd [#allocation4], %s14
      %s16 = sshll.u32 [#allocation3], 4
      %s17 = int_to_ptr.vmem [resolvable:$true] %s16
      %22 = dma.hbm_to_vmem [thread:$0]  %s0, 256, %s17, [#allocation4], 64, 64, 4
    $region5: #{tpu_custom_call.1} parent=1 // pred_fallthru
      _
    // Predicated region
    $region6: #{tpu_custom_call.1} parent=1 // pred_check
      _
    $region7: #{tpu_custom_call.1} parent=1 // pred_check_branch
      %24 = sbr.rel (0) target = $region9
    $region8: #{tpu_custom_call.1} parent=1 // pred_region
      %s26 = ssub.s32 256, 256
      %27 = vsyncadd [#allocation7], %s26
      %s28 = sshll.u32 [#allocation6], 4
      %s29 = int_to_ptr.vmem [resolvable:$true] %s28
      %34 = dma.hbm_to_vmem [thread:$0]  %s1, 256, %s29, [#allocation7], 64, 64, 4
    $region9: #{tpu_custom_call.1} parent=1 // pred_fallthru
      _
    // Predicated region
    $region10: #{tpu_custom_call.1} parent=1 // pred_check
      _
    $region11: #{tpu_custom_call.1} parent=1 // pred_check_branch
      %36 = sbr.rel (0) target = $region13
    $region12: #{tpu_custom_call.1} parent=1 // pred_region
      _
    $region13: #{tpu_custom_call.1} parent=1 // pred_fallthru
      _
    // Predicated region
    $region14: #{tpu_custom_call.1} parent=1 // pred_check
      _
    $region15: #{tpu_custom_call.1} parent=1 // pred_check_branch
      %38 = sbr.rel (0) target = $region17
    $region16: #{tpu_custom_call.1} parent=1 // pred_region
      %39 = dma.done [#allocation4], 256
    $region17: #{tpu_custom_call.1} parent=1 // pred_fallthru
      _
    // Predicated region
    $region18: #{tpu_custom_call.1} parent=1 // pred_check
      _
    $region19: #{tpu_custom_call.1} parent=1 // pred_check_branch
      %41 = sbr.rel (0) target = $region21
    $region20: #{tpu_custom_call.1} parent=1 // pred_region
      %42 = dma.done [#allocation7], 256
    $region21: #{tpu_custom_call.1} parent=1 // pred_fallthru
      _
    %p44 = scmp.eq.s32.totalorder 0, 0
    // Predicated region
    $region22: #{tpu_custom_call.1} parent=1 // pred_check
      %p45 = pneg %p44
    $region23: #{tpu_custom_call.1} parent=1 // pred_check_branch
      %47 = sbr.rel (%p45) target = $region25
    $region24: #{tpu_custom_call.1} parent=1 // pred_region
      %vm48 = vcmask 785408
      %49 = vst.msk [vmem:[#allocation2] sm:$0xff] %vm48, 0.0
      %50 = vst.msk [vmem:[#allocation2 + $0x8] sm:$0xff] %vm48, 0.0
      %51 = vst.msk [vmem:[#allocation2 + $0x10] sm:$0xff] %vm48, 0.0
      %52 = vst.msk [vmem:[#allocation2 + $0x18] sm:$0xff] %vm48, 0.0
    $region25: #{tpu_custom_call.1} parent=1 // pred_fallthru
      _
    %v53 = vld [vmem:[#allocation2] sm:$0xff]
    %v54 = vld [vmem:[#allocation2 + $0x8] sm:$0xff]
    %v55 = vld [vmem:[#allocation2 + $0x10] sm:$0xff]
    %v56 = vld [vmem:[#allocation2 + $0x18] sm:$0xff]
    %v57 = vld [vmem:[#allocation3] sm:$0xf]
    %v58 = vld [vmem:[#allocation3 + $0x4] sm:$0xf]
    %v59 = vld [vmem:[#allocation3 + $0x8] sm:$0xf]
    %v60 = vld [vmem:[#allocation3 + $0xc] sm:$0xf]
    %v61 = vld [vmem:[#allocation6] sm:$0xf]
    %v62 = vld [vmem:[#allocation6 + $0x4] sm:$0xf]
    %v63 = vld [vmem:[#allocation6 + $0x8] sm:$0xf]
    %v64 = vld [vmem:[#allocation6 + $0xc] sm:$0xf]
    %v69 = vunpack.c.l.b16 %v57
    %v70 = vunpack.c.l.b16 %v58
    %v71 = vunpack.c.l.b16 %v59
    %v72 = vunpack.c.l.b16 %v60
    %v73 = vpack.c.b16 %v70, %v69
    %v74 = vpack.c.b16 %v72, %v71
    %v79 = vunpack.c.l.b16 %v61
    %v80 = vunpack.c.l.b16 %v62
    %v81 = vunpack.c.l.b16 %v63
    %v82 = vunpack.c.l.b16 %v64
    %v83 = vpack.c.b16 %v80, %v79
    %v84 = vpack.c.b16 %v82, %v81
    %vm87 = vcmask 261120
    %v89 = vsel %vm87, %v73, 0
    %v92 = vsel %vm87, %v74, 0
    %94 = vmatprep.subr.bf16.mxu0 0
    %95 = vmatpush1.bf16.msra.mxu0 0
    %96 = vmatprep.subr.bf16.mxu0 0
    %97 = vmatpush1.bf16.msra.mxu0 0
    %98 = vmatprep.subr.bf16.mxu0 0
    %99 = vmatpush1.bf16.msra.mxu0 0
    %100 = vmatprep.subr.bf16.mxu0 0
    %101 = vmatpush1.bf16.msra.mxu0 0
    %102 = vmatprep.subr.bf16.mxu0 0
    %103 = vmatpush1.bf16.msra.mxu0 0
    %104 = vmatprep.subr.bf16.mxu0 0
    %105 = vmatpush1.bf16.msra.mxu0 0
    %106 = vmatprep.subr.bf16.mxu0 0
    %107 = vmatpush1.bf16.msra.mxu0 %v84
    %108 = vmatprep.subr.bf16.mxu0 0
    %109 = vmatpush1.bf16.msra.mxu0 %v83
    %110 = vmatprep.subr.bf16.mxu0 0
    %111 = vmatpush2.bf16.msra.mxu0 0
    %112 = vmatprep.subr.bf16.mxu0 0
    %113 = vmatpush2.bf16.msra.mxu0 0
    %114 = vmatprep.subr.bf16.mxu0 0
    %115 = vmatpush2.bf16.msra.mxu0 0
    %116 = vmatprep.subr.bf16.mxu0 0
    %117 = vmatpush2.bf16.msra.mxu0 0
    %118 = vmatprep.subr.bf16.mxu0 0
    %119 = vmatpush2.bf16.msra.mxu0 0
    %120 = vmatprep.subr.bf16.mxu0 0
    %121 = vmatpush2.bf16.msra.mxu0 0
    %122 = vmatprep.subr.bf16.mxu0 0
    %123 = vmatpush2.bf16.msra.mxu0 0
    %124 = vmatprep.subr.bf16.mxu0 0
    %125 = vmatpush2.bf16.msra.mxu0 0
    %126 = vmatprep.mubr.bf16.mxu0 0
    %127 = vmatmul.mubr.bf16.gmra.mxu0 %v89
    %v128 = vpop.f32.mrf.mxu0
    %v129 = vadd.f32 0.0, %v128
    %v130 = vpop.f32.mrf.mxu0
    %v131 = vpop.f32.mrf.mxu0
    %v132 = vadd.f32 0.0, %v131
    %v133 = vpop.f32.mrf.mxu0
    %134 = vmatprep.mubr.bf16.mxu0 0
    %135 = vmatmul.mubr.bf16.gmra.mxu0 %v92
    %v136 = vpop.f32.mrf.mxu0
    %v137 = vadd.f32 0.0, %v136
    %v138 = vpop.f32.mrf.mxu0
    %v139 = vpop.f32.mrf.mxu0
    %v140 = vadd.f32 0.0, %v139
    %v141 = vpop.f32.mrf.mxu0
    %142 = vdwg.mxu0
    %v143 = vadd.f32 %v53, %v129
    %v144 = vadd.f32 %v54, %v132
    %v145 = vadd.f32 %v55, %v137
    %v146 = vadd.f32 %v56, %v140
    %vm147 = vcmask 785408
    %148 = vst.msk [vmem:[#allocation2] sm:$0xff] %vm147, %v143
    %149 = vst.msk [vmem:[#allocation2 + $0x8] sm:$0xff] %vm147, %v144
    %150 = vst.msk [vmem:[#allocation2 + $0x10] sm:$0xff] %vm147, %v145
    %151 = vst.msk [vmem:[#allocation2 + $0x18] sm:$0xff] %vm147, %v146
    // Predicated region
    $region26: #{tpu_custom_call.1} parent=1 // pred_check
      %p152 = pneg %p44
    $region27: #{tpu_custom_call.1} parent=1 // pred_check_branch
      %154 = sbr.rel (%p152) target = $region29
    $region28: #{tpu_custom_call.1} parent=1 // pred_region
      %v155 = vld [vmem:[#allocation2] sm:$0xff]
      %v156 = vld [vmem:[#allocation2 + $0x8] sm:$0xff]
      %v157 = vld [vmem:[#allocation2 + $0x10] sm:$0xff]
      %v158 = vld [vmem:[#allocation2 + $0x18] sm:$0xff]
      %v159 = vld [vmem:[%s2] sm:$0x1]
      %v160 = vunpack.c.l.bf16 %v159
      %v161 = vlaneseq
      %v162 = vshrl.u32 %v161, 7
      %v163 = vsub.s32 0, %v162
      %v164 = vrot.slane %v160, %v163
      %v165 = vadd.f32 %v155, %v164
      %v166 = vadd.f32 %v156, %v164
      %v167 = vadd.f32 %v157, %v164
      %v168 = vadd.f32 %v158, %v164
      %v169 = vpack.c.bf16 %v166, %v165
      %v170 = vpack.c.bf16 %v168, %v167
      %v173 = vunpack.c.l.b16 %v169
      %v174 = vunpack.c.h.b16 %v169
      %v175 = vunpack.c.l.b16 %v170
      %v176 = vunpack.c.h.b16 %v170
      %v177 = vpack.c.b16 %v173, %v173
      %v178 = vpack.c.b16 %v174, %v174
      %v179 = vpack.c.b16 %v175, %v175
      %v180 = vpack.c.b16 %v176, %v176
      %vm185 = vcmask 781312
      %186 = vst.msk [vmem:[#allocation8] sm:$0xf] %vm185, %v177
      %187 = vst.msk [vmem:[#allocation8 + $0x4] sm:$0xf] %vm185, %v178
      %188 = vst.msk [vmem:[#allocation8 + $0x8] sm:$0xf] %vm185, %v179
      %189 = vst.msk [vmem:[#allocation8 + $0xc] sm:$0xf] %vm185, %v180
    $region29: #{tpu_custom_call.1} parent=1 // pred_fallthru
      _
    // Predicated region
    $region30: #{tpu_custom_call.1} parent=1 // pred_check
      _
    $region31: #{tpu_custom_call.1} parent=1 // pred_check_branch
      %191 = sbr.rel (0) target = $region33
    $region32: #{tpu_custom_call.1} parent=1 // pred_region
      %s193 = ssub.s32 256, 256
      %194 = vsyncadd [#allocation5], %s193
      %s195 = sshll.u32 [#allocation8], 4
      %s196 = int_to_ptr.vmem [resolvable:$true] %s195
      %201 = dma.vmem_to_hbm [thread:$0]  %s196, 256, %s3, [#allocation5], 64, 64, 4
    $region33: #{tpu_custom_call.1} parent=1 // pred_fallthru
      _
    // Predicated region
    $region34: #{tpu_custom_call.1} parent=1 // pred_check
      _
    $region35: #{tpu_custom_call.1} parent=1 // pred_check_branch
      %203 = sbr.rel (0) target = $region37
    $region36: #{tpu_custom_call.1} parent=1 // pred_region
      %204 = dma.done [#allocation5], 256
    $region37: #{tpu_custom_call.1} parent=1 // pred_fallthru
      _
    %205 = vsyncpa [#allocation4], 1
    %206 = vsyncpa [#allocation7], 1
    %207 = vsyncpa [#allocation5], 1

</llo_original>
